<compile_context>
chip_gen: v5e
topology: v5e:2x2
jax: 0.10.0
libtpu: 0.0.40
codegen_flags: <defaults>
</compile_context>

<pallas_src>
import jax
import jax.numpy as jnp
from jax.experimental import pallas as pl
from jax.experimental.pallas import tpu as pltpu


def _round_up(x, m):
    return (x + m - 1) // m * m


def _patch_proj_kernel(p_ref, w_ref, b_ref, o_ref):
    # p_ref: (TM, K), w_ref: (K, D), b_ref: (1, D), o_ref: (TM, D)
    acc = jnp.dot(p_ref[...], w_ref[...], preferred_element_type=jnp.float32)
    o_ref[...] = (acc + b_ref[...]).astype(o_ref.dtype)


def patch_embed_pallas(patches, weight_mat, bias_row, *, tm=None,
                       vmem_budget_bytes=16 * 1024 * 1024):
    """patches: (M, K), weight_mat: (K, D), bias_row: (1, D) -> (M, D) f32."""
    M, K = patches.shape
    _, D = weight_mat.shape
    itemsize = jnp.dtype(patches.dtype).itemsize

    # Lane/sublane-dense padding: 128-lane multiples on the contraction and
    # output feature dims, 8-sublane multiple on rows.
    K_pad = _round_up(K, 128)
    D_pad = _round_up(D, 128)
    M_pad = _round_up(M, 8)

    if tm is None:
        # Double-buffered (TM,K) input + (TM,D) f32 output tiles, plus the
        # resident weight/bias, must fit the conservative VMEM budget.
        tm = 512
        while tm > 8:
            working = (2 * tm * (K_pad * itemsize + D_pad * 4)
                       + K_pad * D_pad * itemsize + D_pad * 4)
            if working <= vmem_budget_bytes:
                break
            tm //= 2
    tm = min(tm, M_pad)
    M_pad = _round_up(M_pad, tm)
    grid = (M_pad // tm,)

    patches_p = jnp.zeros((M_pad, K_pad), patches.dtype).at[:M, :K].set(patches)
    weight_p = jnp.zeros((K_pad, D_pad), weight_mat.dtype).at[:K, :D].set(weight_mat)
    bias_p = jnp.zeros((1, D_pad), jnp.float32).at[:, :D].set(
        bias_row.astype(jnp.float32))

    cost = pl.CostEstimate(
        flops=2 * M_pad * K_pad * D_pad,
        bytes_accessed=(M_pad * K_pad + K_pad * D_pad) * itemsize
        + M_pad * D_pad * 4 + D_pad * 4,
        transcendentals=0,
    )

    out = pl.pallas_call(
        _patch_proj_kernel,
        out_shape=jax.ShapeDtypeStruct((M_pad, D_pad), jnp.float32),
        grid_spec=pltpu.PrefetchScalarGridSpec(
            num_scalar_prefetch=0,
            grid=grid,
            in_specs=[
                pl.BlockSpec((tm, K_pad), lambda i: (i, 0)),      # streamed
                pl.BlockSpec((K_pad, D_pad), lambda i: (0, 0)),   # resident
                pl.BlockSpec((1, D_pad), lambda i: (0, 0)),       # resident
            ],
            out_specs=pl.BlockSpec((tm, D_pad), lambda i: (i, 0)),
        ),
        compiler_params=pltpu.CompilerParams(
            dimension_semantics=("parallel",),      # megacore-shardable on v7x
            vmem_limit_bytes=64 * 1024 * 1024,
        ),
        cost_estimate=cost,
    )(patches_p, weight_p, bias_p)

    return out[:M, :D]


def vit_patch_embeddings(images, conv_w, conv_b, n_patches, *,
                         use_bf16_inputs=False):
    """images: (B, C, H, W) NCHW, conv_w: (D, C, ps, ps), conv_b: (D,)."""
    B, C, H, W = images.shape
    D = conv_w.shape[0]
    ps = H // n_patches

    # Extract non-overlapping patches -> (B*n_patches^2, C*ps*ps); flattened
    # patch dim ordered as (c, ki, kj) to match the Conv2d weight layout.
    x = images.reshape(B, C, n_patches, ps, n_patches, ps)
    x = jnp.transpose(x, (0, 2, 4, 1, 3, 5))          # (B, nH, nW, C, ps, ps)
    patches = x.reshape(B * n_patches * n_patches, C * ps * ps)

    w_mat = conv_w.reshape(D, C * ps * ps).T           # (K, D)
    if use_bf16_inputs:                                # halve HBM traffic
        patches = patches.astype(jnp.bfloat16)
        w_mat = w_mat.astype(jnp.bfloat16)
    b_row = conv_b.reshape(1, D).astype(jnp.float32)   # bias add stays f32

    out = patch_embed_pallas(patches, w_mat, b_row)    # (B*N, D) f32
    return out.reshape(B, n_patches * n_patches, D)    # (B, N, hidden_d)


if __name__ == "__main__":
    # Module config: chw=(4, 16, 16), n_patches=4 -> patch_size=4, hidden_d=32
    B, C, H, W = 2, 4, 16, 16
    n_patches = 4
    hidden_d = 32
    ps = H // n_patches

    key = jax.random.PRNGKey(0)
    k_img, k_w, k_b = jax.random.split(key, 3)

    images = jax.random.normal(k_img, (B, C, H, W), dtype=jnp.float32)
    # Deterministic synthetic Conv2d parameters (same shapes as nn.Conv2d).
    fan_in = C * ps * ps
    bound = 1.0 / (fan_in ** 0.5)
    conv_w = jax.random.uniform(k_w, (hidden_d, C, ps, ps),
                                dtype=jnp.float32, minval=-bound, maxval=bound)
    conv_b = jax.random.uniform(k_b, (hidden_d,),
                                dtype=jnp.float32, minval=-bound, maxval=bound)

    # Reference (plain JAX, same math as the PyTorch module).
    xr = images.reshape(B, C, n_patches, ps, n_patches, ps)
    xr = jnp.transpose(xr, (0, 2, 4, 1, 3, 5)).reshape(B, n_patches * n_patches, -1)
    ref = xr @ conv_w.reshape(hidden_d, -1).T + conv_b[None, None, :]

    # f32 path (exact module semantics).
    out = vit_patch_embeddings(images, conv_w, conv_b, n_patches)
    out = jax.block_until_ready(out)
    assert out.shape == (B, n_patches * n_patches, hidden_d)
    assert jnp.allclose(out, ref, atol=1e-4, rtol=1e-4)

    # bf16-input path (v6e/v7x bandwidth optimization); looser tolerance.
    out_bf16 = vit_patch_embeddings(images, conv_w, conv_b, n_patches,
                                    use_bf16_inputs=True)
    out_bf16 = jax.block_until_ready(out_bf16)
    assert jnp.allclose(out_bf16, ref, atol=2e-2, rtol=2e-2)

    print("KERNEL_OK")
</pallas_src>

<mosaic_0001>
module attributes {stable_mosaic.version = 11 : i64} {
  func.func @_patch_proj_kernel(%arg0: i32, %arg1: memref<32x128xf32, #tpu.memory_space<vmem>>, %arg2: memref<128x128xf32, #tpu.memory_space<vmem>>, %arg3: memref<1x128xf32, #tpu.memory_space<vmem>>, %arg4: memref<32x128xf32, #tpu.memory_space<vmem>>) attributes {dimension_semantics = [#tpu.dimension_semantics<parallel>], iteration_bounds = array<i64: 1>, scalar_prefetch = 0 : i64, scratch_operands = 0 : i64, tpu.core_type = #tpu.core_type<tc>, window_params = [{transform_indices = @transform_0, window_bounds = array<i64: 32, 128>}, {pipeline_mode = #tpu.pipeline_mode<synchronous>, transform_indices = @transform_1, window_bounds = array<i64: 128, 128>}, {pipeline_mode = #tpu.pipeline_mode<synchronous>, transform_indices = @transform_2, window_bounds = array<i64: 1, 128>}, {transform_indices = @transform_3, window_bounds = array<i64: 32, 128>}]} {
    %c0 = arith.constant 0 : index
    %c0_0 = arith.constant 0 : index
    %0 = vector.load %arg1[%c0, %c0_0] : memref<32x128xf32, #tpu.memory_space<vmem>>, vector<32x128xf32>
    %c0_1 = arith.constant 0 : index
    %c0_2 = arith.constant 0 : index
    %1 = vector.load %arg2[%c0_1, %c0_2] : memref<128x128xf32, #tpu.memory_space<vmem>>, vector<128x128xf32>
    %cst = arith.constant dense<0.000000e+00> : vector<32x128xf32>
    %2 = tpu.matmul %0, %1, %cst {dimension_numbers = #tpu.dot_dimension_numbers<[1], [0], [0], [1], [0, 0, 1, 1], [], []>} : vector<32x128xf32>, vector<128x128xf32>, vector<32x128xf32> -> vector<32x128xf32>
    %c0_3 = arith.constant 0 : index
    %c0_4 = arith.constant 0 : index
    %3 = vector.load %arg3[%c0_3, %c0_4] : memref<1x128xf32, #tpu.memory_space<vmem>>, vector<1x128xf32>
    %4 = vector.broadcast %3 : vector<1x128xf32> to vector<32x128xf32>
    %5 = arith.addf %2, %4 : vector<32x128xf32>
    %c0_5 = arith.constant 0 : index
    %c0_6 = arith.constant 0 : index
    %6 = vector.load %arg4[%c0_5, %c0_6] : memref<32x128xf32, #tpu.memory_space<vmem>>, vector<32x128xf32>
    tpu.vector_store %arg4[%c0_5, %c0_6], %5 {strides = array<i32>} : memref<32x128xf32, #tpu.memory_space<vmem>>, vector<32x128xf32>,
    return
  }
  func.func @transform_0(%arg0: i32) -> (i32, i32) {
    %c0_i32 = arith.constant 0 : i32
    %c0_i32_0 = arith.constant 0 : i32
    return %arg0, %c0_i32 : i32, i32
  }
  func.func @transform_1(%arg0: i32) -> (i32, i32) {
    %c0_i32 = arith.constant 0 : i32
    %c0_i32_0 = arith.constant 0 : i32
    %c0_i32_1 = arith.constant 0 : i32
    return %c0_i32, %c0_i32_0 : i32, i32
  }
  func.func @transform_2(%arg0: i32) -> (i32, i32) {
    %c0_i32 = arith.constant 0 : i32
    %c0_i32_0 = arith.constant 0 : i32
    %c0_i32_1 = arith.constant 0 : i32
    return %c0_i32, %c0_i32_0 : i32, i32
  }
  func.func @transform_3(%arg0: i32) -> (i32, i32) {
    %c0_i32 = arith.constant 0 : i32
    %c0_i32_0 = arith.constant 0 : i32
    return %arg0, %c0_i32 : i32, i32
  }
}

</mosaic_0001>

<llo_original>
// kernel: tpu_custom_call.1
$region0: #{tpu_custom_call.1}
  #allocation0 [shape = 'u32[]', space=smem, size = 0x4, offset = 0x4, fixed_abs, tag = 'smem constant byte address 0x4 - core index']
  #allocation1 [shape = 'u32[72,128]{1,0:T(1,128)}', space=vmem, size = 0x9000, scoped, tag = 'internal scratch']
  %s0 = inlined_call_operand.hbm [shape: f32[32,128], index: 0, kind: input, shape index: {}]
  %s1 = inlined_call_operand.hbm [shape: f32[128,128], index: 1, kind: input, shape index: {}]
  %s2 = inlined_call_operand.vmem [shape: f32[1,128], index: 2, kind: input, shape index: {}]
  %s3 = inlined_call_operand.hbm [shape: f32[32,128], index: 3, kind: output, shape index: {}]
  %s4 = sld [smem:[#allocation0]]
  $region30: #{tpu_custom_call.1} parent=0
    _
  %s6 = ssub.s32 1, %s4
  %s7 = scalar_select 0, %s6, %s4
  $region1: #{tpu_custom_call.1} parent=0
    #allocation2 [shape = 'u8[16384]{0}', space=vmem, size = 0x4000, scoped, tag = 'input window, operand 0, single buffered']
    #allocation3 [shape = 's32[1]{0}', space=sflag, size = 0x4, scoped, tag = 'scoped memory for tpu_custom_call.1']
    #allocation4 [shape = 's32[1]{0}', space=sflag, size = 0x4, scoped, tag = 'scoped memory for tpu_custom_call.1']
    #allocation5 [shape = 'u8[65536]{0}', space=vmem, size = 0x10000, scoped, tag = 'input window, operand 1, single buffered']
    #allocation6 [shape = 's32[1]{0}', space=sflag, size = 0x4, scoped, tag = 'scoped memory for tpu_custom_call.1']
    #allocation7 [shape = 'u8[16384]{0}', space=vmem, size = 0x4000, scoped, tag = 'output window, operand 0, single buffered']
    %8 = vsyncpa [#allocation3], 0
    %9 = vsyncpa [#allocation6], 0
    %10 = vsyncpa [#allocation4], 0
    // Predicated region
    $region2: #{tpu_custom_call.1} parent=1 // pred_check
      _
    $region3: #{tpu_custom_call.1} parent=1 // pred_check_branch
      %12 = sbr.rel (0) target = $region5
    $region4: #{tpu_custom_call.1} parent=1 // pred_region
      %14 = vsyncadd [#allocation3], 0
      %s15 = sshll.u32 %s0, 4
      %s16 = int_to_ptr.hbm [resolvable:$true] %s15
      %s17 = sshll.u32 [#allocation2], 4
      %s18 = int_to_ptr.vmem [resolvable:$true] %s17
      %23 = dma.hbm_to_vmem [thread:$0]  %s16, 512, %s18, [#allocation3], 128, 128, 8
    $region5: #{tpu_custom_call.1} parent=1 // pred_fallthru
      _
    // Predicated region
    $region6: #{tpu_custom_call.1} parent=1 // pred_check
      _
    $region7: #{tpu_custom_call.1} parent=1 // pred_check_branch
      %25 = sbr.rel (0) target = $region9
    $region8: #{tpu_custom_call.1} parent=1 // pred_region
      %27 = vsyncadd [#allocation6], 0
      %s28 = sshll.u32 %s1, 4
      %s29 = int_to_ptr.hbm [resolvable:$true] %s28
      %s30 = sshll.u32 [#allocation5], 4
      %s31 = int_to_ptr.vmem [resolvable:$true] %s30
      %36 = dma.hbm_to_vmem [thread:$0]  %s29, 2048, %s31, [#allocation6], 128, 128, 8
    $region9: #{tpu_custom_call.1} parent=1 // pred_fallthru
      _
    // Predicated region
    $region10: #{tpu_custom_call.1} parent=1 // pred_check
      _
    $region11: #{tpu_custom_call.1} parent=1 // pred_check_branch
      %38 = sbr.rel (0) target = $region13
    $region12: #{tpu_custom_call.1} parent=1 // pred_region
      _
    $region13: #{tpu_custom_call.1} parent=1 // pred_fallthru
      _
    // Predicated region
    $region14: #{tpu_custom_call.1} parent=1 // pred_check
      _
    $region15: #{tpu_custom_call.1} parent=1 // pred_check_branch
      %40 = sbr.rel (0) target = $region17
    $region16: #{tpu_custom_call.1} parent=1 // pred_region
      %42 = dma.done [#allocation3], 512
    $region17: #{tpu_custom_call.1} parent=1 // pred_fallthru
      _
    // Predicated region
    $region18: #{tpu_custom_call.1} parent=1 // pred_check
      _
    $region19: #{tpu_custom_call.1} parent=1 // pred_check_branch
      %44 = sbr.rel (0) target = $region21
    $region20: #{tpu_custom_call.1} parent=1 // pred_region
      %46 = dma.done [#allocation6], 2048
    $region21: #{tpu_custom_call.1} parent=1 // pred_fallthru
      _
    %v47 = vld [vmem:[#allocation2] sm:$0xff]
    %v48 = vld [vmem:[#allocation2 + $0x8] sm:$0xff]
    %v49 = vld [vmem:[#allocation2 + $0x10] sm:$0xff]
    %v50 = vld [vmem:[#allocation2 + $0x18] sm:$0xff]
    %v51 = vld [vmem:[#allocation5] sm:$0xff]
    %v52 = vld [vmem:[#allocation5 + $0x8] sm:$0xff]
    %v53 = vld [vmem:[#allocation5 + $0x10] sm:$0xff]
    %v54 = vld [vmem:[#allocation5 + $0x18] sm:$0xff]
    %v55 = vld [vmem:[#allocation5 + $0x20] sm:$0xff]
    %v56 = vld [vmem:[#allocation5 + $0x28] sm:$0xff]
    %v57 = vld [vmem:[#allocation5 + $0x30] sm:$0xff]
    %v58 = vld [vmem:[#allocation5 + $0x38] sm:$0xff]
    %v59 = vld [vmem:[#allocation5 + $0x40] sm:$0xff]
    %v60 = vld [vmem:[#allocation5 + $0x48] sm:$0xff]
    %v61 = vld [vmem:[#allocation5 + $0x50] sm:$0xff]
    %v62 = vld [vmem:[#allocation5 + $0x58] sm:$0xff]
    %v63 = vld [vmem:[#allocation5 + $0x60] sm:$0xff]
    %v64 = vld [vmem:[#allocation5 + $0x68] sm:$0xff]
    %v65 = vld [vmem:[#allocation5 + $0x70] sm:$0xff]
    %v66 = vld [vmem:[#allocation5 + $0x78] sm:$0xff]
    %v67 = vld [vmem:[%s2] sm:$0x1]
    %v69 = vperm.slane %v67, 0
    %71 = vmatpush.msra.mxu0 %v66
    %72 = vmatpush.msra.mxu0 %v65
    %73 = vmatpush.msra.mxu0 %v64
    %74 = vmatpush.msra.mxu0 %v63
    %75 = vmatpush.msra.mxu0 %v62
    %76 = vmatpush.msra.mxu0 %v61
    %77 = vmatpush.msra.mxu0 %v60
    %78 = vmatpush.msra.mxu0 %v59
    %79 = vmatpush.msra.mxu0 %v58
    %80 = vmatpush.msra.mxu0 %v57
    %81 = vmatpush.msra.mxu0 %v56
    %82 = vmatpush.msra.mxu0 %v55
    %83 = vmatpush.msra.mxu0 %v54
    %84 = vmatpush.msra.mxu0 %v53
    %85 = vmatpush.msra.mxu0 %v52
    %86 = vmatpush.msra.mxu0 %v51
    %87 = vmatmul.f32.gmra.mxu0 %v47
    %v88 = vpop.f32.mrf.mxu0
    %v89 = vadd.f32 %v69, %v88
    %90 = vmatmul.f32.gmra.mxu0 %v48
    %v91 = vpop.f32.mrf.mxu0
    %v92 = vadd.f32 %v69, %v91
    %93 = vmatmul.f32.gmra.mxu0 %v49
    %v94 = vpop.f32.mrf.mxu0
    %v95 = vadd.f32 %v69, %v94
    %96 = vmatmul.f32.gmra.mxu0 %v50
    %v97 = vpop.f32.mrf.mxu0
    %v98 = vadd.f32 %v69, %v97
    %99 = vdwg.mxu0
    %100 = vst [vmem:[#allocation7] sm:$0xff] %v89
    %101 = vst [vmem:[#allocation7 + $0x8] sm:$0xff] %v92
    %102 = vst [vmem:[#allocation7 + $0x10] sm:$0xff] %v95
    %103 = vst [vmem:[#allocation7 + $0x18] sm:$0xff] %v98
    // Predicated region
    $region22: #{tpu_custom_call.1} parent=1 // pred_check
      _
    $region23: #{tpu_custom_call.1} parent=1 // pred_check_branch
      %105 = sbr.rel (0) target = $region25
    $region24: #{tpu_custom_call.1} parent=1 // pred_region
      %107 = vsyncadd [#allocation4], 0
      %s108 = sshll.u32 [#allocation7], 4
      %s109 = int_to_ptr.vmem [resolvable:$true] %s108
      %s110 = sshll.u32 %s3, 4
      %s111 = int_to_ptr.hbm [resolvable:$true] %s110
      %116 = dma.vmem_to_hbm [thread:$0]  %s109, 512, %s111, [#allocation4], 128, 128, 8
    $region25: #{tpu_custom_call.1} parent=1 // pred_fallthru
      _
    // Predicated region
    $region26: #{tpu_custom_call.1} parent=1 // pred_check
      _
    $region27: #{tpu_custom_call.1} parent=1 // pred_check_branch
      %118 = sbr.rel (0) target = $region29
    $region28: #{tpu_custom_call.1} parent=1 // pred_region
      %120 = dma.done [#allocation4], 512
    $region29: #{tpu_custom_call.1} parent=1 // pred_fallthru
      _
    %121 = vsyncpa [#allocation3], 1
    %122 = vsyncpa [#allocation6], 1
    %123 = vsyncpa [#allocation4], 1

</llo_original>
